<compile_context>
chip_gen: v5e
topology: v5e:2x2
jax: 0.10.0
libtpu: 0.0.40
codegen_flags: <defaults>
</compile_context>

<pallas_src>
import jax
import jax.numpy as jnp
from jax.experimental import pallas as pl
from jax.experimental.pallas import tpu as pltpu

H = 32   # hidden_size
V = 64   # input_size (vocab size)
T = 8    # demo sequence length


def encoder_gru_kernel(tok_ref, emb_ref, h0_ref, wih_ref, whh_ref,
                       brz_ref, bin_ref, bhn_ref, out_ref, h_state):
    """One GRU time step per grid iteration; hidden state carried in VMEM scratch.

    tok_ref : SMEM (T,)   int32   scalar-prefetched token ids
    emb_ref : VMEM (V, H)         embedding table (resident, 8 KiB)
    h0_ref  : VMEM (1, H)         initial hidden state
    wih_ref : VMEM (H, 3H)        input-to-hidden weights, columns [r|z|n]
    whh_ref : VMEM (H, 3H)        hidden-to-hidden weights, columns [r|z|n]
    brz_ref : VMEM (1, 2H)        folded r/z biases (b_ih + b_hh)
    bin_ref : VMEM (1, H)         input-path n-gate bias
    bhn_ref : VMEM (1, H)         hidden-path n-gate bias
    out_ref : VMEM (T, H)         per-step hidden states (resident accumulator)
    h_state : VMEM (1, H) scratch carried hidden state
    """
    t = pl.program_id(0)

    @pl.when(t == 0)
    def _():
        h_state[...] = h0_ref[...]

    tok = tok_ref[t]
    x = emb_ref[pl.ds(tok, 1), :]            # (1, H) embedding row gather in VMEM
    h = h_state[...]                         # (1, H)

    gi = jnp.dot(x, wih_ref[...], preferred_element_type=jnp.float32)   # (1, 3H)
    gh = jnp.dot(h, whh_ref[...], preferred_element_type=jnp.float32)   # (1, 3H)

    # PyTorch nn.GRU gate math (gate order r, z, n), r/z biases pre-folded.
    rz = jax.nn.sigmoid(gi[:, :2 * H] + gh[:, :2 * H] + brz_ref[...])   # (1, 2H)
    r = rz[:, :H]
    z = rz[:, H:]
    n = jnp.tanh(gi[:, 2 * H:] + bin_ref[...] + r * (gh[:, 2 * H:] + bhn_ref[...]))
    h_new = (1.0 - z) * n + z * h

    h_state[...] = h_new
    out_ref[pl.ds(t, 1), :] = h_new.astype(out_ref.dtype)


def encoder_forward_seq(tokens, hidden, fused_params):
    """Run the fused GRU over a whole token sequence in one pallas_call.

    tokens : (T,) int32
    hidden : (1, 1, H) float32 initial hidden state
    returns (output (T, 1, H), hidden_n (1, 1, H))
    """
    emb, wih, whh, brz, b_in, b_hn = fused_params
    seq_len = tokens.shape[0]
    h0 = hidden.reshape(1, H).astype(jnp.float32)

    const = lambda t, tok: (0, 0)   # weights/biases/table/h0/output stay resident

    out = pl.pallas_call(
        encoder_gru_kernel,
        out_shape=jax.ShapeDtypeStruct((seq_len, H), jnp.float32),
        grid_spec=pltpu.PrefetchScalarGridSpec(
            num_scalar_prefetch=1,
            grid=(seq_len,),
            in_specs=[
                pl.BlockSpec((V, H), const),          # embedding table
                pl.BlockSpec((1, H), const),          # h0
                pl.BlockSpec((H, 3 * H), const),      # wih (H, 3H)
                pl.BlockSpec((H, 3 * H), const),      # whh (H, 3H)
                pl.BlockSpec((1, 2 * H), const),      # folded r/z biases
                pl.BlockSpec((1, H), const),          # b_in
                pl.BlockSpec((1, H), const),          # b_hn
            ],
            out_specs=pl.BlockSpec((seq_len, H), const),
            scratch_shapes=[pltpu.VMEM((1, H), jnp.float32)],
        ),
        compiler_params=pltpu.CompilerParams(
            dimension_semantics=("arbitrary",)),      # hidden state carried -> sequential
    )(tokens.astype(jnp.int32), emb, h0, wih, whh, brz, b_in, b_hn)

    output = out.reshape(seq_len, 1, H)
    hidden_n = out[seq_len - 1:seq_len].reshape(1, 1, H)   # single layer: h_n == output[-1]
    return output, hidden_n


def encoder_forward(token, hidden, fused_params):
    """Mirrors Encoder.forward(input, hidden) for a single token."""
    output, hidden_n = encoder_forward_seq(
        jnp.reshape(token, (1,)).astype(jnp.int32), hidden, fused_params)
    return output.reshape(1, 1, H), hidden_n


def make_params(key):
    """Raw parameters in PyTorch layout (Embedding ~ N(0,1); GRU ~ U(-1/sqrt(H), 1/sqrt(H)))."""
    k_emb, k_wih, k_whh, k_bih, k_bhh = jax.random.split(key, 5)
    emb = jax.random.normal(k_emb, (V, H), jnp.float32)
    bound = 1.0 / (H ** 0.5)
    w_ih = jax.random.uniform(k_wih, (3 * H, H), jnp.float32, -bound, bound)  # rows [W_ir|W_iz|W_in]
    w_hh = jax.random.uniform(k_whh, (3 * H, H), jnp.float32, -bound, bound)  # rows [W_hr|W_hz|W_hn]
    b_ih = jax.random.uniform(k_bih, (3 * H,), jnp.float32, -bound, bound)
    b_hh = jax.random.uniform(k_bhh, (3 * H,), jnp.float32, -bound, bound)
    return emb, w_ih, w_hh, b_ih, b_hh


def fuse_params(raw):
    """Kernel layout: pre-transposed (H, 3H) weights, folded r/z biases, lane-dense rows."""
    emb, w_ih, w_hh, b_ih, b_hh = raw
    wih_k = jnp.asarray(w_ih.T, jnp.float32)                       # (H, 3H), x @ wih_k == x @ W_ih^T
    whh_k = jnp.asarray(w_hh.T, jnp.float32)                       # (H, 3H)
    b_rz = (b_ih[:2 * H] + b_hh[:2 * H]).reshape(1, 2 * H)         # folded r/z biases
    b_in = b_ih[2 * H:].reshape(1, H)
    b_hn = b_hh[2 * H:].reshape(1, H)
    return emb, wih_k, whh_k, b_rz, b_in, b_hn


def encoder_seq_ref(tokens, hidden, raw):
    """Pure-JAX reference using the *raw* PyTorch layout and the exact nn.GRU equations.

    This validates both the kernel and the fused-layout / bias-folding transform.
    """
    emb, w_ih, w_hh, b_ih, b_hh = raw

    def step(h, tok):
        x = emb[tok]                                  # (H,)
        gi = w_ih @ x + b_ih                          # (3H,)
        gh = w_hh @ h + b_hh                          # (3H,)
        r = jax.nn.sigmoid(gi[:H] + gh[:H])
        z = jax.nn.sigmoid(gi[H:2 * H] + gh[H:2 * H])
        n = jnp.tanh(gi[2 * H:] + r * gh[2 * H:])
        h_new = (1.0 - z) * n + z * h
        return h_new, h_new

    h_n, outs = jax.lax.scan(step, hidden.reshape(H), tokens)
    return outs.reshape(-1, 1, H), h_n.reshape(1, 1, H)


if __name__ == "__main__":
    key = jax.random.PRNGKey(0)
    k_params, k_tok = jax.random.split(key)

    raw_params = make_params(k_params)
    params = fuse_params(raw_params)

    tokens = jax.random.randint(k_tok, (T,), 0, V, dtype=jnp.int32)   # token sequence
    hidden0 = jnp.zeros((1, 1, H), jnp.float32)                       # Encoder.initHidden()

    # Fused full-sequence run (one pallas_call for all T steps).
    output, hidden_n = encoder_forward_seq(tokens, hidden0, params)
    output = jax.block_until_ready(output)
    hidden_n = jax.block_until_ready(hidden_n)

    out_ref, hid_ref = encoder_seq_ref(tokens, hidden0, raw_params)
    assert output.shape == (T, 1, H) and hidden_n.shape == (1, 1, H)
    assert jnp.allclose(output, out_ref, atol=1e-4, rtol=1e-4)
    assert jnp.allclose(hidden_n, hid_ref, atol=1e-4, rtol=1e-4)

    # Single-step call (exactly Encoder.forward semantics for one token).
    out1, hid1 = encoder_forward(tokens[0:1], hidden0, params)
    out1 = jax.block_until_ready(out1)
    assert out1.shape == (1, 1, H) and hid1.shape == (1, 1, H)
    assert jnp.allclose(out1, out_ref[0:1], atol=1e-4, rtol=1e-4)
    assert jnp.allclose(hid1, out_ref[0:1], atol=1e-4, rtol=1e-4)

    print("KERNEL_OK")
</pallas_src>

<mosaic_0001>
module attributes {stable_mosaic.version = 11 : i64} {
  func.func @encoder_gru_kernel(%arg0: i32, %arg1: memref<8xi32, #tpu.memory_space<smem>>, %arg2: memref<64x32xf32, #tpu.memory_space<vmem>>, %arg3: memref<1x32xf32, #tpu.memory_space<vmem>>, %arg4: memref<32x96xf32, #tpu.memory_space<vmem>>, %arg5: memref<32x96xf32, #tpu.memory_space<vmem>>, %arg6: memref<1x64xf32, #tpu.memory_space<vmem>>, %arg7: memref<1x32xf32, #tpu.memory_space<vmem>>, %arg8: memref<1x32xf32, #tpu.memory_space<vmem>>, %arg9: memref<8x32xf32, #tpu.memory_space<vmem>>, %arg10: memref<1x32xf32, #tpu.memory_space<vmem>>) attributes {dimension_semantics = [#tpu.dimension_semantics<arbitrary>], iteration_bounds = array<i64: 8>, scalar_prefetch = 1 : i64, scratch_operands = 1 : i64, tpu.core_type = #tpu.core_type<tc>, window_params = [{pipeline_mode = #tpu.pipeline_mode<synchronous>, transform_indices = @transform_0, window_bounds = array<i64: 64, 32>}, {pipeline_mode = #tpu.pipeline_mode<synchronous>, transform_indices = @transform_1, window_bounds = array<i64: 1, 32>}, {pipeline_mode = #tpu.pipeline_mode<synchronous>, transform_indices = @transform_2, window_bounds = array<i64: 32, 96>}, {pipeline_mode = #tpu.pipeline_mode<synchronous>, transform_indices = @transform_3, window_bounds = array<i64: 32, 96>}, {pipeline_mode = #tpu.pipeline_mode<synchronous>, transform_indices = @transform_4, window_bounds = array<i64: 1, 64>}, {pipeline_mode = #tpu.pipeline_mode<synchronous>, transform_indices = @transform_5, window_bounds = array<i64: 1, 32>}, {pipeline_mode = #tpu.pipeline_mode<synchronous>, transform_indices = @transform_6, window_bounds = array<i64: 1, 32>}, {pipeline_mode = #tpu.pipeline_mode<synchronous>, transform_indices = @transform_7, window_bounds = array<i64: 8, 32>}]} {
    %c0_i32 = arith.constant 0 : i32
    %0 = arith.cmpi eq, %arg0, %c0_i32 : i32
    %1 = arith.extui %0 : i1 to i32
    %c0_i32_0 = arith.constant 0 : i32
    %2 = arith.cmpi ne, %1, %c0_i32_0 : i32
    scf.if %2 {
      %c0_19 = arith.constant 0 : index
      %c0_20 = arith.constant 0 : index
      %41 = vector.load %arg3[%c0_19, %c0_20] : memref<1x32xf32, #tpu.memory_space<vmem>>, vector<1x32xf32>
      %c0_21 = arith.constant 0 : index
      %c0_22 = arith.constant 0 : index
      %42 = vector.load %arg10[%c0_21, %c0_22] : memref<1x32xf32, #tpu.memory_space<vmem>>, vector<1x32xf32>
      tpu.vector_store %arg10[%c0_21, %c0_22], %41 {strides = array<i32>} : memref<1x32xf32, #tpu.memory_space<vmem>>, vector<1x32xf32>,
    } else {
    }
    %3 = arith.index_cast %arg0 : i32 to index
    %4 = memref.load %arg1[%3] : memref<8xi32, #tpu.memory_space<smem>>
    %5 = arith.index_cast %4 : i32 to index
    %c0 = arith.constant 0 : index
    %6 = vector.load %arg2[%5, %c0] : memref<64x32xf32, #tpu.memory_space<vmem>>, vector<1x32xf32>
    %c0_1 = arith.constant 0 : index
    %c0_2 = arith.constant 0 : index
    %7 = vector.load %arg10[%c0_1, %c0_2] : memref<1x32xf32, #tpu.memory_space<vmem>>, vector<1x32xf32>
    %c0_3 = arith.constant 0 : index
    %c0_4 = arith.constant 0 : index
    %8 = vector.load %arg4[%c0_3, %c0_4] : memref<32x96xf32, #tpu.memory_space<vmem>>, vector<32x96xf32>
    %cst = arith.constant dense<0.000000e+00> : vector<1x96xf32>
    %9 = tpu.matmul %6, %8, %cst {dimension_numbers = #tpu.dot_dimension_numbers<[1], [0], [0], [1], [0, 0, 1, 1], [], []>} : vector<1x32xf32>, vector<32x96xf32>, vector<1x96xf32> -> vector<1x96xf32>
    %c0_5 = arith.constant 0 : index
    %c0_6 = arith.constant 0 : index
    %10 = vector.load %arg5[%c0_5, %c0_6] : memref<32x96xf32, #tpu.memory_space<vmem>>, vector<32x96xf32>
    %cst_7 = arith.constant dense<0.000000e+00> : vector<1x96xf32>
    %11 = tpu.matmul %7, %10, %cst_7 {dimension_numbers = #tpu.dot_dimension_numbers<[1], [0], [0], [1], [0, 0, 1, 1], [], []>} : vector<1x32xf32>, vector<32x96xf32>, vector<1x96xf32> -> vector<1x96xf32>
    %12 = vector.extract_strided_slice %9 {offsets = [0, 0], sizes = [1, 64], strides = [1, 1]} : vector<1x96xf32> to vector<1x64xf32>
    %13 = vector.extract_strided_slice %11 {offsets = [0, 0], sizes = [1, 64], strides = [1, 1]} : vector<1x96xf32> to vector<1x64xf32>
    %14 = arith.addf %12, %13 : vector<1x64xf32>
    %c0_8 = arith.constant 0 : index
    %c0_9 = arith.constant 0 : index
    %15 = vector.load %arg6[%c0_8, %c0_9] : memref<1x64xf32, #tpu.memory_space<vmem>>, vector<1x64xf32>
    %16 = arith.addf %14, %15 : vector<1x64xf32>
    %17 = arith.negf %16 : vector<1x64xf32>
    %18 = math.exp %17 : vector<1x64xf32>
    %cst_10 = arith.constant 1.000000e+00 : f32
    %19 = vector.broadcast %cst_10 : f32 to vector<1x64xf32>
    %20 = arith.addf %19, %18 : vector<1x64xf32>
    %21 = arith.divf %19, %20 : vector<1x64xf32>
    %22 = vector.extract_strided_slice %21 {offsets = [0, 0], sizes = [1, 32], strides = [1, 1]} : vector<1x64xf32> to vector<1x32xf32>
    %23 = vector.extract_strided_slice %21 {offsets = [0, 32], sizes = [1, 32], strides = [1, 1]} : vector<1x64xf32> to vector<1x32xf32>
    %24 = vector.extract_strided_slice %9 {offsets = [0, 64], sizes = [1, 32], strides = [1, 1]} : vector<1x96xf32> to vector<1x32xf32>
    %c0_11 = arith.constant 0 : index
    %c0_12 = arith.constant 0 : index
    %25 = vector.load %arg7[%c0_11, %c0_12] : memref<1x32xf32, #tpu.memory_space<vmem>>, vector<1x32xf32>
    %26 = arith.addf %24, %25 : vector<1x32xf32>
    %27 = vector.extract_strided_slice %11 {offsets = [0, 64], sizes = [1, 32], strides = [1, 1]} : vector<1x96xf32> to vector<1x32xf32>
    %c0_13 = arith.constant 0 : index
    %c0_14 = arith.constant 0 : index
    %28 = vector.load %arg8[%c0_13, %c0_14] : memref<1x32xf32, #tpu.memory_space<vmem>>, vector<1x32xf32>
    %29 = arith.addf %27, %28 : vector<1x32xf32>
    %30 = arith.mulf %22, %29 : vector<1x32xf32>
    %31 = arith.addf %26, %30 : vector<1x32xf32>
    %32 = math.tanh %31 : vector<1x32xf32>
    %cst_15 = arith.constant 1.000000e+00 : f32
    %33 = vector.broadcast %cst_15 : f32 to vector<1x32xf32>
    %34 = arith.subf %33, %23 : vector<1x32xf32>
    %35 = arith.mulf %34, %32 : vector<1x32xf32>
    %36 = arith.mulf %23, %7 : vector<1x32xf32>
    %37 = arith.addf %35, %36 : vector<1x32xf32>
    %c0_16 = arith.constant 0 : index
    %c0_17 = arith.constant 0 : index
    %38 = vector.load %arg10[%c0_16, %c0_17] : memref<1x32xf32, #tpu.memory_space<vmem>>, vector<1x32xf32>
    tpu.vector_store %arg10[%c0_16, %c0_17], %37 {strides = array<i32>} : memref<1x32xf32, #tpu.memory_space<vmem>>, vector<1x32xf32>,
    %39 = arith.index_cast %arg0 : i32 to index
    %c0_18 = arith.constant 0 : index
    %40 = vector.load %arg9[%39, %c0_18] : memref<8x32xf32, #tpu.memory_space<vmem>>, vector<1x32xf32>
    tpu.vector_store %arg9[%39, %c0_18], %37 {strides = array<i32>} : memref<8x32xf32, #tpu.memory_space<vmem>>, vector<1x32xf32>,
    return
  }
  func.func @transform_0(%arg0: i32, %arg1: memref<8xi32, #tpu.memory_space<smem>>) -> (i32, i32) {
    %c0_i32 = arith.constant 0 : i32
    %c0_i32_0 = arith.constant 0 : i32
    %c0_i32_1 = arith.constant 0 : i32
    return %c0_i32, %c0_i32_0 : i32, i32
  }
  func.func @transform_1(%arg0: i32, %arg1: memref<8xi32, #tpu.memory_space<smem>>) -> (i32, i32) {
    %c0_i32 = arith.constant 0 : i32
    %c0_i32_0 = arith.constant 0 : i32
    %c0_i32_1 = arith.constant 0 : i32
    return %c0_i32, %c0_i32_0 : i32, i32
  }
  func.func @transform_2(%arg0: i32, %arg1: memref<8xi32, #tpu.memory_space<smem>>) -> (i32, i32) {
    %c0_i32 = arith.constant 0 : i32
    %c0_i32_0 = arith.constant 0 : i32
    %c0_i32_1 = arith.constant 0 : i32
    return %c0_i32, %c0_i32_0 : i32, i32
  }
  func.func @transform_3(%arg0: i32, %arg1: memref<8xi32, #tpu.memory_space<smem>>) -> (i32, i32) {
    %c0_i32 = arith.constant 0 : i32
    %c0_i32_0 = arith.constant 0 : i32
    %c0_i32_1 = arith.constant 0 : i32
    return %c0_i32, %c0_i32_0 : i32, i32
  }
  func.func @transform_4(%arg0: i32, %arg1: memref<8xi32, #tpu.memory_space<smem>>) -> (i32, i32) {
    %c0_i32 = arith.constant 0 : i32
    %c0_i32_0 = arith.constant 0 : i32
    %c0_i32_1 = arith.constant 0 : i32
    return %c0_i32, %c0_i32_0 : i32, i32
  }
  func.func @transform_5(%arg0: i32, %arg1: memref<8xi32, #tpu.memory_space<smem>>) -> (i32, i32) {
    %c0_i32 = arith.constant 0 : i32
    %c0_i32_0 = arith.constant 0 : i32
    %c0_i32_1 = arith.constant 0 : i32
    return %c0_i32, %c0_i32_0 : i32, i32
  }
  func.func @transform_6(%arg0: i32, %arg1: memref<8xi32, #tpu.memory_space<smem>>) -> (i32, i32) {
    %c0_i32 = arith.constant 0 : i32
    %c0_i32_0 = arith.constant 0 : i32
    %c0_i32_1 = arith.constant 0 : i32
    return %c0_i32, %c0_i32_0 : i32, i32
  }
  func.func @transform_7(%arg0: i32, %arg1: memref<8xi32, #tpu.memory_space<smem>>) -> (i32, i32) {
    %c0_i32 = arith.constant 0 : i32
    %c0_i32_0 = arith.constant 0 : i32
    %c0_i32_1 = arith.constant 0 : i32
    return %c0_i32, %c0_i32_0 : i32, i32
  }
}

</mosaic_0001>

<llo_original>
// kernel: tpu_custom_call.1
$region0: #{tpu_custom_call.1}
  #allocation0 [shape = 'u32[]', space=smem, size = 0x4, offset = 0x4, fixed_abs, tag = 'smem constant byte address 0x4 - core index']
  #allocation1 [shape = 'u32[72,128]{1,0:T(1,128)}', space=vmem, size = 0x9000, scoped, tag = 'internal scratch']
  #allocation2 [shape = 'f32[1,32]{1,0:T(1,128)}', space=vmem, size = 0x200, scoped, tag = 'scratch operand']
  #allocation3 [shape = 's32[1]{0}', space=sflag, size = 0x4, scoped, tag = 'scoped memory for tpu_custom_call.1']
  #allocation4 [shape = 'u8[512]{0}', space=smem, size = 0x200, scoped, tag = 'prefetched SMEM operand 0']
  %s0 = inlined_call_operand.vmem [shape: s32[8], index: 0, kind: input, shape index: {}]
  %s1 = inlined_call_operand.vmem [shape: f32[64,32], index: 1, kind: input, shape index: {}]
  %s2 = inlined_call_operand.vmem [shape: f32[1,32], index: 2, kind: input, shape index: {}]
  %s3 = inlined_call_operand.vmem [shape: f32[32,96], index: 3, kind: input, shape index: {}]
  %s4 = inlined_call_operand.vmem [shape: f32[32,96], index: 4, kind: input, shape index: {}]
  %s5 = inlined_call_operand.vmem [shape: f32[1,64], index: 5, kind: input, shape index: {}]
  %s6 = inlined_call_operand.vmem [shape: f32[1,32], index: 6, kind: input, shape index: {}]
  %s7 = inlined_call_operand.vmem [shape: f32[1,32], index: 7, kind: input, shape index: {}]
  %s8 = inlined_call_operand.hbm [shape: f32[8,32], index: 8, kind: output, shape index: {}]
  %s9 = sld [smem:[#allocation0]]
  $region65: #{tpu_custom_call.1} parent=0
    _
  %s11 = ssub.s32 1, %s9
  %s12 = scalar_select 0, %s11, %s9
  %s14 = sshll.u32 %s0, 4
  %s15 = int_to_ptr.vmem [resolvable:$true] %s14
  %17 = dma.vmem_to_smem %s15, 16, [#allocation4], [#allocation3]
  %19 = dma.done [#allocation3], 16
  %20 = sfence
  $region1: #{tpu_custom_call.1} parent=0
    #allocation5 [shape = 'u8[4096]{0}', space=vmem, size = 0x1000, scoped, tag = 'output window, operand 0, single buffered']
    #allocation6 [shape = 's32[2]{0}', space=sflag, size = 0x8, scoped, tag = 'scoped memory for tpu_custom_call.1']
    %21 = vsyncpa [#allocation6], 0
    loop: start=0, step=1, limit=10
    $region2: #{tpu_custom_call.1} parent=1 // loop_pre_header
      _
    $region3: #{tpu_custom_call.1} parent=1 // loop_header
      %s23 = sphi 0, %s27
      %p24 = scmp.ge.s32.totalorder %s23, 10
      %s31 = sphi 0, %s31
      %s33 = sphi 0, %s31
      %s34 = sphi 0, %s33
      %s48 = sphi 0, %s34
      %s52 = sphi 0, %s52
      %s54 = sphi 0, %s52
      %s55 = sphi 0, %s54
      %s69 = sphi 0, %s55
      %s73 = sphi 0, %s73
      %s75 = sphi 0, %s73
      %s76 = sphi 0, %s75
      %s90 = sphi 0, %s76
      %s94 = sphi 0, %s94
      %s96 = sphi 0, %s94
      %s97 = sphi 0, %s96
      %s111 = sphi 0, %s97
      %s115 = sphi 0, %s115
      %s117 = sphi 0, %s115
      %s118 = sphi 0, %s117
      %s132 = sphi 0, %s118
      %s136 = sphi 0, %s136
      %s138 = sphi 0, %s136
      %s139 = sphi 0, %s138
      %s153 = sphi 0, %s139
      %s157 = sphi 0, %s157
      %s159 = sphi 0, %s157
      %s160 = sphi 0, %s159
      %s174 = sphi 0, %s160
      %s178 = sphi 0, %s178
      %s180 = sphi 0, %s178
      %s181 = sphi 0, %s180
      %s195 = sphi 0, %s181
    $region4: #{tpu_custom_call.1} parent=1 // loop_header_branch
      %26 = sbr.rel (%p24) target = $region8
    $region5: #{tpu_custom_call.1} parent=1 // loop_body
      %s28 = ssub.s32 %s23, 1
      %s29 = ssub.s32 %s23, 2
      %s30 = sadd.s32 %s23, 1
      %s32 = sadd.s32 %s31, 1
      %p35 = scmp.eq.s32.totalorder %s23, 7
      %p36 = scmp.ne.s32.totalorder %s31, %s33
      %p37 = scmp.eq.s32.totalorder %s23, 0
      %p38 = por %p36, %p37
      %p39 = scmp.ne.s32.totalorder %s31, %s33
      %p40 = scmp.eq.s32.totalorder %s28, 7
      %p41 = por %p39, %p40
      %p42 = scmp.ne.s32.totalorder %s33, %s34
      %p43 = scmp.eq.s32.totalorder %s28, 0
      %p44 = por %p42, %p43
      %p45 = scmp.ne.s32.totalorder %s33, %s34
      %p46 = scmp.eq.s32.totalorder %s29, 7
      %p47 = por %p45, %p46
      %p49 = scmp.ne.s32.totalorder %s34, %s48
      %p50 = scmp.eq.s32.totalorder %s29, 0
      %p51 = por %p49, %p50
      %s53 = sadd.s32 %s52, 1
      %p56 = scmp.eq.s32.totalorder %s23, 7
      %p57 = scmp.ne.s32.totalorder %s52, %s54
      %p58 = scmp.eq.s32.totalorder %s23, 0
      %p59 = por %p57, %p58
      %p60 = scmp.ne.s32.totalorder %s52, %s54
      %p61 = scmp.eq.s32.totalorder %s28, 7
      %p62 = por %p60, %p61
      %p63 = scmp.ne.s32.totalorder %s54, %s55
      %p64 = scmp.eq.s32.totalorder %s28, 0
      %p65 = por %p63, %p64
      %p66 = scmp.ne.s32.totalorder %s54, %s55
      %p67 = scmp.eq.s32.totalorder %s29, 7
      %p68 = por %p66, %p67
      %p70 = scmp.ne.s32.totalorder %s55, %s69
      %p71 = scmp.eq.s32.totalorder %s29, 0
      %p72 = por %p70, %p71
      %s74 = sadd.s32 %s73, 1
      %p77 = scmp.eq.s32.totalorder %s23, 7
      %p78 = scmp.ne.s32.totalorder %s73, %s75
      %p79 = scmp.eq.s32.totalorder %s23, 0
      %p80 = por %p78, %p79
      %p81 = scmp.ne.s32.totalorder %s73, %s75
      %p82 = scmp.eq.s32.totalorder %s28, 7
      %p83 = por %p81, %p82
      %p84 = scmp.ne.s32.totalorder %s75, %s76
      %p85 = scmp.eq.s32.totalorder %s28, 0
      %p86 = por %p84, %p85
      %p87 = scmp.ne.s32.totalorder %s75, %s76
      %p88 = scmp.eq.s32.totalorder %s29, 7
      %p89 = por %p87, %p88
      %p91 = scmp.ne.s32.totalorder %s76, %s90
      %p92 = scmp.eq.s32.totalorder %s29, 0
      %p93 = por %p91, %p92
      %s95 = sadd.s32 %s94, 1
      %p98 = scmp.eq.s32.totalorder %s23, 7
      %p99 = scmp.ne.s32.totalorder %s94, %s96
      %p100 = scmp.eq.s32.totalorder %s23, 0
      %p101 = por %p99, %p100
      %p102 = scmp.ne.s32.totalorder %s94, %s96
      %p103 = scmp.eq.s32.totalorder %s28, 7
      %p104 = por %p102, %p103
      %p105 = scmp.ne.s32.totalorder %s96, %s97
      %p106 = scmp.eq.s32.totalorder %s28, 0
      %p107 = por %p105, %p106
      %p108 = scmp.ne.s32.totalorder %s96, %s97
      %p109 = scmp.eq.s32.totalorder %s29, 7
      %p110 = por %p108, %p109
      %p112 = scmp.ne.s32.totalorder %s97, %s111
      %p113 = scmp.eq.s32.totalorder %s29, 0
      %p114 = por %p112, %p113
      %s116 = sadd.s32 %s115, 1
      %p119 = scmp.eq.s32.totalorder %s23, 7
      %p120 = scmp.ne.s32.totalorder %s115, %s117
      %p121 = scmp.eq.s32.totalorder %s23, 0
      %p122 = por %p120, %p121
      %p123 = scmp.ne.s32.totalorder %s115, %s117
      %p124 = scmp.eq.s32.totalorder %s28, 7
      %p125 = por %p123, %p124
      %p126 = scmp.ne.s32.totalorder %s117, %s118
      %p127 = scmp.eq.s32.totalorder %s28, 0
      %p128 = por %p126, %p127
      %p129 = scmp.ne.s32.totalorder %s117, %s118
      %p130 = scmp.eq.s32.totalorder %s29, 7
      %p131 = por %p129, %p130
      %p133 = scmp.ne.s32.totalorder %s118, %s132
      %p134 = scmp.eq.s32.totalorder %s29, 0
      %p135 = por %p133, %p134
      %s137 = sadd.s32 %s136, 1
      %p140 = scmp.eq.s32.totalorder %s23, 7
      %p141 = scmp.ne.s32.totalorder %s136, %s138
      %p142 = scmp.eq.s32.totalorder %s23, 0
      %p143 = por %p141, %p142
      %p144 = scmp.ne.s32.totalorder %s136, %s138
      %p145 = scmp.eq.s32.totalorder %s28, 7
      %p146 = por %p144, %p145
      %p147 = scmp.ne.s32.totalorder %s138, %s139
      %p148 = scmp.eq.s32.totalorder %s28, 0
      %p149 = por %p147, %p148
      %p150 = scmp.ne.s32.totalorder %s138, %s139
      %p151 = scmp.eq.s32.totalorder %s29, 7
      %p152 = por %p150, %p151
      %p154 = scmp.ne.s32.totalorder %s139, %s153
      %p155 = scmp.eq.s32.totalorder %s29, 0
      %p156 = por %p154, %p155
      %s158 = sadd.s32 %s157, 1
      %p161 = scmp.eq.s32.totalorder %s23, 7
      %p162 = scmp.ne.s32.totalorder %s157, %s159
      %p163 = scmp.eq.s32.totalorder %s23, 0
      %p164 = por %p162, %p163
      %p165 = scmp.ne.s32.totalorder %s157, %s159
      %p166 = scmp.eq.s32.totalorder %s28, 7
      %p167 = por %p165, %p166
      %p168 = scmp.ne.s32.totalorder %s159, %s160
      %p169 = scmp.eq.s32.totalorder %s28, 0
      %p170 = por %p168, %p169
      %p171 = scmp.ne.s32.totalorder %s159, %s160
      %p172 = scmp.eq.s32.totalorder %s29, 7
      %p173 = por %p171, %p172
      %p175 = scmp.ne.s32.totalorder %s160, %s174
      %p176 = scmp.eq.s32.totalorder %s29, 0
      %p177 = por %p175, %p176
      %s179 = sadd.s32 %s178, 1
      %p182 = scmp.eq.s32.totalorder %s23, 7
      %p183 = scmp.ne.s32.totalorder %s178, %s180
      %p184 = scmp.eq.s32.totalorder %s23, 0
      %p185 = por %p183, %p184
      %p186 = scmp.ne.s32.totalorder %s178, %s180
      %p187 = scmp.eq.s32.totalorder %s28, 7
      %p188 = por %p186, %p187
      %p189 = scmp.ne.s32.totalorder %s180, %s181
      %p190 = scmp.eq.s32.totalorder %s28, 0
      %p191 = por %p189, %p190
      %p192 = scmp.ne.s32.totalorder %s180, %s181
      %p193 = scmp.eq.s32.totalorder %s29, 7
      %p194 = por %p192, %p193
      %p196 = scmp.ne.s32.totalorder %s181, %s195
      %p197 = scmp.eq.s32.totalorder %s29, 0
      %p198 = por %p196, %p197
      %p199 = scmp.le.s32.totalorder 1, %s23
      %p200 = scmp.lt.s32.totalorder %s23, 9
      %p201 = pnand %p199, %p200
      %p202 = pneg %p201
      // Predicated region
      $region9: #{tpu_custom_call.1} parent=5 // pred_check
        _
      $region10: #{tpu_custom_call.1} parent=5 // pred_check_branch
        %204 = sbr.rel (%p201) target = $region12
      $region11: #{tpu_custom_call.1} parent=5 // pred_region
        %s205 = ssub.s32 %s23, 1
        // Predicated region
        $region13: #{tpu_custom_call.1} parent=11 // pred_check
          %p206 = pneg %p44
        $region14: #{tpu_custom_call.1} parent=11 // pred_check_branch
          %208 = sbr.rel (%p206) target = $region16
        $region15: #{tpu_custom_call.1} parent=11 // pred_region
          _
        $region16: #{tpu_custom_call.1} parent=11 // pred_fallthru
          _
        // Predicated region
        $region17: #{tpu_custom_call.1} parent=11 // pred_check
          %p209 = pneg %p65
        $region18: #{tpu_custom_call.1} parent=11 // pred_check_branch
          %211 = sbr.rel (%p209) target = $region20
        $region19: #{tpu_custom_call.1} parent=11 // pred_region
          _
        $region20: #{tpu_custom_call.1} parent=11 // pred_fallthru
          _
        // Predicated region
        $region21: #{tpu_custom_call.1} parent=11 // pred_check
          %p212 = pneg %p86
        $region22: #{tpu_custom_call.1} parent=11 // pred_check_branch
          %214 = sbr.rel (%p212) target = $region24
        $region23: #{tpu_custom_call.1} parent=11 // pred_region
          _
        $region24: #{tpu_custom_call.1} parent=11 // pred_fallthru
          _
        // Predicated region
        $region25: #{tpu_custom_call.1} parent=11 // pred_check
          %p215 = pneg %p107
        $region26: #{tpu_custom_call.1} parent=11 // pred_check_branch
          %217 = sbr.rel (%p215) target = $region28
        $region27: #{tpu_custom_call.1} parent=11 // pred_region
          _
        $region28: #{tpu_custom_call.1} parent=11 // pred_fallthru
          _
        // Predicated region
        $region29: #{tpu_custom_call.1} parent=11 // pred_check
          %p218 = pneg %p128
        $region30: #{tpu_custom_call.1} parent=11 // pred_check_branch
          %220 = sbr.rel (%p218) target = $region32
        $region31: #{tpu_custom_call.1} parent=11 // pred_region
          _
        $region32: #{tpu_custom_call.1} parent=11 // pred_fallthru
          _
        // Predicated region
        $region33: #{tpu_custom_call.1} parent=11 // pred_check
          %p221 = pneg %p149
        $region34: #{tpu_custom_call.1} parent=11 // pred_check_branch
          %223 = sbr.rel (%p221) target = $region36
        $region35: #{tpu_custom_call.1} parent=11 // pred_region
          _
        $region36: #{tpu_custom_call.1} parent=11 // pred_fallthru
          _
        // Predicated region
        $region37: #{tpu_custom_call.1} parent=11 // pred_check
          %p224 = pneg %p170
        $region38: #{tpu_custom_call.1} parent=11 // pred_check_branch
          %226 = sbr.rel (%p224) target = $region40
        $region39: #{tpu_custom_call.1} parent=11 // pred_region
          _
        $region40: #{tpu_custom_call.1} parent=11 // pred_fallthru
          _
      $region12: #{tpu_custom_call.1} parent=5 // pred_fallthru
        _
      %p227 = scmp.lt.s32.totalorder %s23, 8
      // Predicated region
      $region41: #{tpu_custom_call.1} parent=5 // pred_check
        %p228 = pneg %p227
      $region42: #{tpu_custom_call.1} parent=5 // pred_check_branch
        %230 = sbr.rel (%p228) target = $region44
      $region43: #{tpu_custom_call.1} parent=5 // pred_region
        _
      $region44: #{tpu_custom_call.1} parent=5 // pred_fallthru
        _
      %p231 = scmp.le.s32.totalorder 1, %s23
      %p232 = scmp.lt.s32.totalorder %s23, 9
      %p233 = pnand %p231, %p232
      %p234 = pneg %p233
      // Predicated region
      $region45: #{tpu_custom_call.1} parent=5 // pred_check
        _
      $region46: #{tpu_custom_call.1} parent=5 // pred_check_branch
        %236 = sbr.rel (%p233) target = $region48
      $region47: #{tpu_custom_call.1} parent=5 // pred_region
        %s237 = ssub.s32 %s23, 1
        %p238 = pneg %p44
        %p239 = pneg %p41
        %p240 = pneg %p65
        %p241 = pneg %p62
        %p242 = pneg %p86
        %p243 = pneg %p83
        %p244 = pneg %p107
        %p245 = pneg %p104
        %p246 = pneg %p128
        %p247 = pneg %p125
        %p248 = pneg %p149
        %p249 = pneg %p146
        %p250 = pneg %p170
        %p251 = pneg %p167
        %p252 = pneg %p191
        %p253 = pneg %p188
        %p254 = scmp.eq.s32.totalorder %s28, 0
        // Predicated region
        $region49: #{tpu_custom_call.1} parent=47 // pred_check
          %p255 = pneg %p254
        $region50: #{tpu_custom_call.1} parent=47 // pred_check_branch
          %257 = sbr.rel (%p255) target = $region52
        $region51: #{tpu_custom_call.1} parent=47 // pred_region
          %v258 = vld [vmem:[%s2] sm:$0x1]
          %vm259 = vcmask 253952
          %260 = vst.msk [vmem:[#allocation2] sm:$0x1] %vm259, %v258
        $region52: #{tpu_custom_call.1} parent=47 // pred_fallthru
          _
        %s261 = sld [smem:[#allocation4 + %s28]]
        %s262 = scalar_lea.vmem %s1, %s261
        %v263 = vld [vmem:[%s262] sm:$0x1]
        %v264 = vld [vmem:[#allocation2] sm:$0x1]
        %v265 = vld [vmem:[%s3] sm:$0xff]
        %v266 = vld [vmem:[%s3 + $0x8] sm:$0xff]
        %v267 = vld [vmem:[%s3 + $0x10] sm:$0xff]
        %v268 = vld [vmem:[%s3 + $0x18] sm:$0xff]
        %vm269 = vcmask 261120
        %v271 = vsel %vm269, %v263, 0
        %273 = vmatpush.msra.mxu0 0.0
        %274 = vmatpush.msra.mxu0 0.0
        %275 = vmatpush.msra.mxu0 0.0
        %276 = vmatpush.msra.mxu0 0.0
        %277 = vmatpush.msra.mxu0 0.0
        %278 = vmatpush.msra.mxu0 0.0
        %279 = vmatpush.msra.mxu0 0.0
        %280 = vmatpush.msra.mxu0 0.0
        %281 = vmatpush.msra.mxu0 0.0
        %282 = vmatpush.msra.mxu0 0.0
        %283 = vmatpush.msra.mxu0 0.0
        %284 = vmatpush.msra.mxu0 0.0
        %285 = vmatpush.msra.mxu0 %v268
        %286 = vmatpush.msra.mxu0 %v267
        %287 = vmatpush.msra.mxu0 %v266
        %288 = vmatpush.msra.mxu0 %v265
        %289 = vmatmul.f32.gmra.mxu0 %v271
        %v290 = vpop.f32.mrf.mxu0
        %v291 = vadd.f32 0.0, %v290
        %292 = vdwg.mxu0
        %v293 = vld [vmem:[%s4] sm:$0xff]
        %v294 = vld [vmem:[%s4 + $0x8] sm:$0xff]
        %v295 = vld [vmem:[%s4 + $0x10] sm:$0xff]
        %v296 = vld [vmem:[%s4 + $0x18] sm:$0xff]
        %v298 = vsel %vm269, %v264, 0
        %300 = vmatpush.msra.mxu0 0.0
        %301 = vmatpush.msra.mxu0 0.0
        %302 = vmatpush.msra.mxu0 0.0
        %303 = vmatpush.msra.mxu0 0.0
        %304 = vmatpush.msra.mxu0 0.0
        %305 = vmatpush.msra.mxu0 0.0
        %306 = vmatpush.msra.mxu0 0.0
        %307 = vmatpush.msra.mxu0 0.0
        %308 = vmatpush.msra.mxu0 0.0
        %309 = vmatpush.msra.mxu0 0.0
        %310 = vmatpush.msra.mxu0 0.0
        %311 = vmatpush.msra.mxu0 0.0
        %312 = vmatpush.msra.mxu0 %v296
        %313 = vmatpush.msra.mxu0 %v295
        %314 = vmatpush.msra.mxu0 %v294
        %315 = vmatpush.msra.mxu0 %v293
        %316 = vmatmul.f32.gmra.mxu0 %v298
        %v317 = vpop.f32.mrf.mxu0
        %v318 = vadd.f32 0.0, %v317
        %319 = vdwg.mxu0
        %v320 = vadd.f32 %v291, %v318
        %v321 = vld [vmem:[%s5] sm:$0x1]
        %v322 = vadd.f32 %v320, %v321
        %v323 = vxor.u32 %v322, 2147483648
        %v324 = vmul.f32 %v323, 1.442695
        %v325 = vpow.pop %v324
        %v326 = vadd.f32 %v325, 1.0
        %v327 = vrcp.pop %v326
        %v328 = vmul.f32 %v326, %v327
        %v329 = vsub.f32 1.0, %v328
        %v330 = vmul.f32 %v327, %v329
        %v331 = vadd.f32 %v327, %v330
        %vm332 = vweird.f32 %v326
        %vm333 = vweird.f32 %v327
        %vm334 = vmor %vm332, %vm333
        %v335 = vsel %vm334, %v327, %v331
        %v336 = vand.u32 2147483647, %v326
        %vm337 = vcmp.eq.f32.partialorder %v336, 8.507059e+37
        %v338 = vand.u32 %v326, 2147483648
        %v339 = vor.u32 1.1754944e-38, %v338
        %v340 = vsel %vm337, %v339, %v335
        %v341 = vmul.f32 1.0, %v340
        %v342 = vld [vmem:[%s6] sm:$0x1]
        %v344 = vperm.slane %v342, 0
        %345 = vrot.lane.b32.xlu0 %v344, 64
        %v346 = vpop.permute.xlu0 %345
        %v348 = vadd.f32 %v291, %v346
        %v349 = vld [vmem:[%s7] sm:$0x1]
        %v351 = vperm.slane %v349, 0
        %352 = vrot.lane.b32.xlu0 %v351, 64
        %v353 = vpop.permute.xlu0 %352
        %v355 = vadd.f32 %v318, %v353
        %357 = vrot.lane.b32.xlu0 %v355, 64
        %v358 = vpop.permute.xlu0 %357
        %v360 = vmul.f32 %v341, %v358
        %362 = vrot.lane.b32.xlu0 %v360, 64
        %v363 = vpop.permute.xlu0 %362
        %v365 = vadd.f32 %v348, %v363
        %v366 = vtanh.pop %v365
        %v367 = vsub.f32 1.0, %v341
        %369 = vrot.lane.b32.xlu0 %v366, 96
        %v370 = vpop.permute.xlu0 %369
        %v372 = vmul.f32 %v367, %v370
        %v373 = vperm.slane %v264, 0
        %374 = vrot.lane.b32.xlu0 %v373, 32
        %v375 = vpop.permute.xlu0 %374
        %v377 = vmul.f32 %v341, %v375
        %v378 = vadd.f32 %v372, %v377
        %380 = vrot.lane.b32.xlu0 %v378, 96
        %v381 = vpop.permute.xlu0 %380
        %vm383 = vcmask 253952
        %384 = vst.msk [vmem:[#allocation2] sm:$0x1] %vm383, %v381
        %s385 = scalar_lea.vmem [#allocation5], %s28
        %386 = vst.msk [vmem:[%s385] sm:$0x1] %vm383, %v381
        // Predicated region
        $region53: #{tpu_custom_call.1} parent=47 // pred_check
          %p387 = pneg %p188
        $region54: #{tpu_custom_call.1} parent=47 // pred_check_branch
          %389 = sbr.rel (%p387) target = $region56
        $region55: #{tpu_custom_call.1} parent=47 // pred_region
          %391 = vsyncadd [#allocation6], 0
          %s393 = sshll.u32 [#allocation5], 4
          %s394 = int_to_ptr.vmem [resolvable:$true] %s393
          %s395 = sshll.u32 %s8, 4
          %s396 = int_to_ptr.hbm [resolvable:$true] %s395
          %398 = dma.vmem_to_hbm [thread:$0]  %s394, 128, %s396, [#allocation6]
        $region56: #{tpu_custom_call.1} parent=47 // pred_fallthru
          _
        // Predicated region
        $region57: #{tpu_custom_call.1} parent=47 // pred_check
          %p399 = pneg %p188
        $region58: #{tpu_custom_call.1} parent=47 // pred_check_branch
          %401 = sbr.rel (%p399) target = $region60
        $region59: #{tpu_custom_call.1} parent=47 // pred_region
          %403 = dma.done [#allocation6], 128
        $region60: #{tpu_custom_call.1} parent=47 // pred_fallthru
          _
      $region48: #{tpu_custom_call.1} parent=5 // pred_fallthru
        _
      %p404 = scmp.le.s32.totalorder 2, %s23
      // Predicated region
      $region61: #{tpu_custom_call.1} parent=5 // pred_check
        %p405 = pneg %p404
      $region62: #{tpu_custom_call.1} parent=5 // pred_check_branch
        %407 = sbr.rel (%p405) target = $region64
      $region63: #{tpu_custom_call.1} parent=5 // pred_region
        %s408 = ssub.s32 %s23, 2
      $region64: #{tpu_custom_call.1} parent=5 // pred_fallthru
        _
    $region6: #{tpu_custom_call.1} parent=1 // loop_footer
      %s27 = sadd.s32 1, %s23
    $region7: #{tpu_custom_call.1} parent=1 // loop_footer_branch
      %22 = sbr.rel target = $region3
    $region8: #{tpu_custom_call.1} parent=1 // loop_exit
      _
    %409 = vsyncpa [#allocation6], 1
    %s410 = scalar_lea.sflag [#allocation6], 1
    %411 = vsyncpa %s410, 1

</llo_original>
